<compile_context>
chip_gen: v7x
topology: tpu7x:2x2x1
jax: 0.10.0
libtpu: 0.0.40
codegen_flags: <defaults>
</compile_context>

<pallas_src>
import jax
import jax.numpy as jnp
from jax.experimental import pallas as pl
from jax.experimental.pallas import tpu as pltpu


def _rope_cache_kernel(inv_freq_ref, cos_ref, sin_ref):
    # inv_freq_ref: (1, dim//2) f32 ; cos_ref/sin_ref: (tile_s, dim) out dtype
    tile_s = cos_ref.shape[0]
    half = inv_freq_ref.shape[1]

    # Absolute position index for this row-tile (offset by the grid step),
    # broadcast along the lane (rotary-feature) axis.
    row0 = pl.program_id(0) * tile_s
    t = (jax.lax.broadcasted_iota(jnp.int32, (tile_s, half), 0) + row0)
    t = t.astype(jnp.float32)

    freqs = t * inv_freq_ref[...]                 # (tile_s, half) f32

    # Transcendentals on the half-width tile only; cast once, store twice.
    c = jnp.cos(freqs).astype(cos_ref.dtype)
    s = jnp.sin(freqs).astype(sin_ref.dtype)

    cos_ref[:, :half] = c
    cos_ref[:, half:] = c
    sin_ref[:, :half] = s
    sin_ref[:, half:] = s


def deepseek_v2_rotary_embedding(x, seq_len, dim, base=10000.0, tile_s=2048):
    """Returns (cos, sin), each (seq_len, dim) in x.dtype."""
    assert dim % 2 == 0
    half = dim // 2

    # Parameter setup (glue, plain JAX) -- identical formula to the reference.
    inv_freq = 1.0 / (base ** (jnp.arange(0, dim, 2, dtype=jnp.float32) / dim))
    inv_freq = inv_freq.reshape(1, half)

    out_dtype = x.dtype

    # Tile over seq_len. A single block when the cache is small; otherwise a
    # sublane-aligned tile (multiple of 8). Ragged last tiles are clipped by
    # Pallas on writeback.
    if tile_s >= seq_len:
        tile_s = seq_len
    else:
        tile_s = max(8, (tile_s // 8) * 8)

    grid = (pl.cdiv(seq_len, tile_s),)

    cos, sin = pl.pallas_call(
        _rope_cache_kernel,
        out_shape=(
            jax.ShapeDtypeStruct((seq_len, dim), out_dtype),
            jax.ShapeDtypeStruct((seq_len, dim), out_dtype),
        ),
        grid=grid,
        in_specs=[pl.BlockSpec((1, half), lambda i: (0, 0))],
        out_specs=(
            pl.BlockSpec((tile_s, dim), lambda i: (i, 0)),
            pl.BlockSpec((tile_s, dim), lambda i: (i, 0)),
        ),
        compiler_params=pltpu.CompilerParams(
            dimension_semantics=("parallel",),
        ),
    )(inv_freq)
    return cos, sin


def _reference(x, seq_len, dim, base=10000.0):
    inv_freq = 1.0 / (base ** (jnp.arange(0, dim, 2, dtype=jnp.float32) / dim))
    t = jnp.arange(seq_len, dtype=jnp.float32)
    freqs = jnp.outer(t, inv_freq)
    emb = jnp.concatenate([freqs, freqs], axis=-1)
    return jnp.cos(emb).astype(x.dtype), jnp.sin(emb).astype(x.dtype)


if __name__ == "__main__":
    key = jax.random.PRNGKey(0)

    # Small shapes: x ~ (batch, num_heads, seq, head_dim); only dtype is used.
    batch, heads, seq_len, dim = 2, 4, 8, 32
    x = jax.random.normal(key, (batch, heads, seq_len, dim), dtype=jnp.float32)

    cos, sin = deepseek_v2_rotary_embedding(x, seq_len=seq_len, dim=dim)
    jax.block_until_ready((cos, sin))

    cos_ref, sin_ref = _reference(x, seq_len, dim)
    assert cos.shape == (seq_len, dim) and sin.shape == (seq_len, dim)
    assert cos.dtype == x.dtype and sin.dtype == x.dtype
    assert jnp.allclose(cos, cos_ref, atol=1e-5, rtol=1e-5)
    assert jnp.allclose(sin, sin_ref, atol=1e-5, rtol=1e-5)

    # Exercise the multi-tile path (offset iota + ragged last tile + bf16 cast).
    seq_len2, dim2 = 72, 32
    x2 = jax.random.normal(key, (1, 1, seq_len2, dim2), dtype=jnp.bfloat16)
    cos2, sin2 = deepseek_v2_rotary_embedding(x2, seq_len=seq_len2, dim=dim2,
                                              tile_s=16)
    jax.block_until_ready((cos2, sin2))
    cos2_ref, sin2_ref = _reference(x2, seq_len2, dim2)
    assert cos2.shape == (seq_len2, dim2) and cos2.dtype == jnp.bfloat16
    assert jnp.allclose(cos2.astype(jnp.float32), cos2_ref.astype(jnp.float32),
                        atol=1e-2, rtol=1e-2)
    assert jnp.allclose(sin2.astype(jnp.float32), sin2_ref.astype(jnp.float32),
                        atol=1e-2, rtol=1e-2)

    print("KERNEL_OK")
</pallas_src>

<mosaic_0001>
module attributes {stable_mosaic.version = 11 : i64} {
  func.func @_rope_cache_kernel(%arg0: i32, %arg1: memref<1x16xf32, #tpu.memory_space<vmem>>, %arg2: memref<8x32xf32, #tpu.memory_space<vmem>>, %arg3: memref<8x32xf32, #tpu.memory_space<vmem>>) attributes {dimension_semantics = [#tpu.dimension_semantics<parallel>], iteration_bounds = array<i64: 1>, scalar_prefetch = 0 : i64, scratch_operands = 0 : i64, tpu.core_type = #tpu.core_type<tc>, window_params = [{pipeline_mode = #tpu.pipeline_mode<synchronous>, transform_indices = @transform_0, window_bounds = array<i64: 1, 16>}, {transform_indices = @transform_1, window_bounds = array<i64: 8, 32>}, {transform_indices = @transform_2, window_bounds = array<i64: 8, 32>}]} {
    %c8_i32 = arith.constant 8 : i32
    %0 = arith.muli %arg0, %c8_i32 : i32
    %1 = tpu.iota {dimensions = array<i32: 0>} : vector<8x16xi32>
    %2 = vector.broadcast %0 : i32 to vector<8x16xi32>
    %3 = arith.addi %1, %2 : vector<8x16xi32>
    %4 = arith.sitofp %3 : vector<8x16xi32> to vector<8x16xf32>
    %c0 = arith.constant 0 : index
    %c0_0 = arith.constant 0 : index
    %5 = vector.load %arg1[%c0, %c0_0] : memref<1x16xf32, #tpu.memory_space<vmem>>, vector<1x16xf32>
    %6 = vector.broadcast %5 : vector<1x16xf32> to vector<8x16xf32>
    %7 = arith.mulf %4, %6 : vector<8x16xf32>
    %8 = math.cos %7 : vector<8x16xf32>
    %9 = math.sin %7 : vector<8x16xf32>
    %c0_1 = arith.constant 0 : index
    %c0_2 = arith.constant 0 : index
    %10 = vector.load %arg2[%c0_1, %c0_2] : memref<8x32xf32, #tpu.memory_space<vmem>>, vector<8x16xf32>
    tpu.vector_store %arg2[%c0_1, %c0_2], %8 {strides = array<i32>} : memref<8x32xf32, #tpu.memory_space<vmem>>, vector<8x16xf32>,
    %c0_3 = arith.constant 0 : index
    %c16 = arith.constant 16 : index
    %11 = vector.load %arg2[%c0_3, %c16] : memref<8x32xf32, #tpu.memory_space<vmem>>, vector<8x16xf32>
    tpu.vector_store %arg2[%c0_3, %c16], %8 {strides = array<i32>} : memref<8x32xf32, #tpu.memory_space<vmem>>, vector<8x16xf32>,
    %c0_4 = arith.constant 0 : index
    %c0_5 = arith.constant 0 : index
    %12 = vector.load %arg3[%c0_4, %c0_5] : memref<8x32xf32, #tpu.memory_space<vmem>>, vector<8x16xf32>
    tpu.vector_store %arg3[%c0_4, %c0_5], %9 {strides = array<i32>} : memref<8x32xf32, #tpu.memory_space<vmem>>, vector<8x16xf32>,
    %c0_6 = arith.constant 0 : index
    %c16_7 = arith.constant 16 : index
    %13 = vector.load %arg3[%c0_6, %c16_7] : memref<8x32xf32, #tpu.memory_space<vmem>>, vector<8x16xf32>
    tpu.vector_store %arg3[%c0_6, %c16_7], %9 {strides = array<i32>} : memref<8x32xf32, #tpu.memory_space<vmem>>, vector<8x16xf32>,
    return
  }
  func.func @transform_0(%arg0: i32) -> (i32, i32) {
    %c0_i32 = arith.constant 0 : i32
    %c0_i32_0 = arith.constant 0 : i32
    %c0_i32_1 = arith.constant 0 : i32
    return %c0_i32, %c0_i32_0 : i32, i32
  }
  func.func @transform_1(%arg0: i32) -> (i32, i32) {
    %c0_i32 = arith.constant 0 : i32
    %c0_i32_0 = arith.constant 0 : i32
    return %arg0, %c0_i32 : i32, i32
  }
  func.func @transform_2(%arg0: i32) -> (i32, i32) {
    %c0_i32 = arith.constant 0 : i32
    %c0_i32_0 = arith.constant 0 : i32
    return %arg0, %c0_i32 : i32, i32
  }
}

</mosaic_0001>

<llo_original>
// kernel: tpu_custom_call.1
$region0: #{tpu_custom_call.1}
  #allocation0 [shape = 'u32[]', space=smem, size = 0x4, offset = 0x4, fixed_abs, tag = 'smem constant byte address 0x4 - core index']
  #allocation1 [shape = 'u32[144,128]{1,0:T(1,128)}', space=vmem, size = 0x12000, scoped, tag = 'internal scratch']
  %s0 = inlined_call_operand.hbm [shape: f32[1,16], index: 0, kind: input, shape index: {}]
  %s1 = inlined_call_operand.hbm [shape: f32[8,32], index: 1, kind: output, shape index: {0}]
  %s2 = inlined_call_operand.hbm [shape: f32[8,32], index: 2, kind: output, shape index: {1}]
  %3 = xla_tuple %s1, %s2
  %s4 = sld [smem:[#allocation0]]
  $region26: #{tpu_custom_call.1} parent=0
    _
  %s6 = ssub.s32 1, %s4
  %s7 = scalar_select 0, %s6, %s4
  $region1: #{tpu_custom_call.1} parent=0
    #allocation2 [shape = 'u8[512]{0}', space=vmem, size = 0x400, scoped, tag = 'input window, operand 0, single buffered']
    #allocation3 [shape = 's32[1]{0}', space=sflag, size = 0x4, scoped, tag = 'scoped memory for tpu_custom_call.1']
    #allocation4 [shape = 's32[1]{0}', space=sflag, size = 0x4, scoped, tag = 'scoped memory for tpu_custom_call.1']
    #allocation5 [shape = 'u8[4096]{0}', space=vmem, size = 0x1000, scoped, tag = 'output window, operand 0, single buffered']
    #allocation6 [shape = 'u8[4096]{0}', space=vmem, size = 0x1000, scoped, tag = 'output window, operand 1, single buffered']
    #allocation7 [shape = 's32[1]{0}', space=sflag, size = 0x4, scoped, tag = 'scoped memory for tpu_custom_call.1']
    %8 = vsyncpa [#allocation3], 0
    %9 = vsyncpa [#allocation4], 0
    %10 = vsyncpa [#allocation7], 0
    // Predicated region
    $region2: #{tpu_custom_call.1} parent=1 // pred_check
      _
    $region3: #{tpu_custom_call.1} parent=1 // pred_check_branch
      %12 = sbr.rel (0) target = $region5
    $region4: #{tpu_custom_call.1} parent=1 // pred_region
      %s14 = ssub.s32 16, 16
      %15 = vsyncadd [#allocation3], %s14
      %s17 = sshll.u32 [#allocation2], 4
      %s18 = int_to_ptr.vmem [resolvable:$true] %s17
      %20 = dma.hbm_to_vmem [thread:$0]  %s0, 16, %s18, [#allocation3]
    $region5: #{tpu_custom_call.1} parent=1 // pred_fallthru
      _
    // Predicated region
    $region6: #{tpu_custom_call.1} parent=1 // pred_check
      _
    $region7: #{tpu_custom_call.1} parent=1 // pred_check_branch
      %22 = sbr.rel (0) target = $region9
    $region8: #{tpu_custom_call.1} parent=1 // pred_region
      %23 = dma.done [#allocation3], 16
    $region9: #{tpu_custom_call.1} parent=1 // pred_fallthru
      _
    %s24 = smul.u32 0, 8
    %v25 = vlaneseq
    %v26 = vshrl.u32 %v25, 7
    %v27 = vstv %s24
    %v28 = vadd.s32 %v26, %v27
    %v29 = vcvt.s32.f32 %v28
    %v30 = vld [vmem:[#allocation2] sm:$0x1]
    %v32 = vlaneseq
    %v33 = vshrl.u32 %v32, 7
    %v34 = vsub.s32 0, %v33
    %v35 = vrot.slane %v30, %v34
    %v37 = vmul.f32 %v29, %v35
    %v38 = vand.u32 2147483647, %v37
    %vm39 = vcmp.le.f32.partialorder %v38, 0.7853982
    %vm40 = vcmp.lt.s32.totalorder %v37, 0
    %v41 = vand.u32 %v37, 2139095040
    %v42 = vshrl.u32 %v41, 23
    %v43 = vsub.s32 %v42, 127
    %v44 = vand.u32 2147483647, %v37
    %v45 = vand.u32 %v44, 8388607
    %v46 = vor.u32 %v45, 8388608
    %v47 = vsub.s32 0, %v46
    %v48 = vadd.s32 %v43, 1
    %vm49 = vcmp.gt.s32.totalorder %v48, 0
    %v50 = vsel %vm49, %v48, 0
    %v51 = vshrl.u32 %v50, 5
    %v52 = vand.u32 %v50, 31
    %v53 = vsub.s32 32, %v52
    %v54 = vshrl.u32 683565275, %v53
    %v55 = vshll.u32 683565275, %v52
    %v56 = vshrl.u32 2475754826, %v53
    %v57 = vor.u32 %v55, %v56
    %v58 = vshll.u32 2475754826, %v52
    %v59 = vshrl.u32 2131351028, %v53
    %v60 = vor.u32 %v58, %v59
    %v61 = vshll.u32 2131351028, %v52
    %v62 = vshrl.u32 2102212464, %v53
    %v63 = vor.u32 %v61, %v62
    %v64 = vshll.u32 2102212464, %v52
    %v65 = vshrl.u32 920167782, %v53
    %v66 = vor.u32 %v64, %v65
    %v67 = vshll.u32 920167782, %v52
    %v68 = vshrl.u32 1326507024, %v53
    %v69 = vor.u32 %v67, %v68
    %vm70 = vcmp.lt.s32.totalorder %v51, 1
    %vm71 = vcmp.lt.s32.totalorder %v51, 2
    %vm72 = vcmp.lt.s32.totalorder %v51, 3
    %vm73 = vcmp.lt.s32.totalorder %v51, 4
    %v74 = vsel %vm70, %v54, %v57
    %v75 = vsel %vm73, %v63, 2102212464
    %v76 = vsel %vm72, %v60, %v75
    %v77 = vsel %vm71, %v74, %v76
    %v78 = vsel %vm70, %v57, %v60
    %v79 = vsel %vm73, %v66, 920167782
    %v80 = vsel %vm72, %v63, %v79
    %v81 = vsel %vm71, %v78, %v80
    %v82 = vsel %vm70, %v60, %v63
    %v83 = vsel %vm73, %v69, 1326507024
    %v84 = vsel %vm72, %v66, %v83
    %v85 = vsel %vm71, %v82, %v84
    %v86 = vshll.u32 %v46, 8
    %v87 = vmul.u32.u64.compose %v86, %v85
    %v88 = vextract.low.u32 %v87
    %v89 = vextract.high.u32 %v87
    %v90 = vmul.u32.u64.compose %v86, %v81
    %v91 = vextract.low.u32 %v90
    %v92 = vextract.high.u32 %v90
    %v93 = vmul.u32 %v86, %v77
    %v94 = vadd.s32 %v89, %v91
    %vm95 = vc.u32 %v89, %v91
    %v96 = vadd.s32 %v92, 1
    %v97 = vsel %vm95, %v96, %v92
    %v98 = vadd.s32 %v93, %v97
    %v99 = vadd.s32 %v98, 536870912
    %v100 = vshrl.u32 %v99, 30
    %v101 = vshll.u32 %v100, 30
    %v102 = vsub.s32 %v98, %v101
    %vm103 = vcmp.lt.s32.totalorder %v102, 0
    %v104 = vsub.s32 0, %v102
    %v105 = vsel %vm103, %v104, %v102
    %v106 = vclz %v105
    %v107 = vsub.s32 %v106, 2
    %vm108 = vcmp.gt.s32.totalorder 0, %v107
    %v109 = vsel %vm108, 0, %v107
    %v110 = vsub.s32 32, %v109
    %v111 = vshll.u32 %v102, %v109
    %v112 = vshrl.u32 %v94, %v110
    %v113 = vor.u32 %v111, %v112
    %v114 = vsub.s32 4294967266, %v109
    %v115 = vadd.s32 %v114, 127
    %v116 = vshll.u32 %v115, 23
    %v117 = vor.u32 4788187, %v116
    %v118 = vand.u32 2147483647, %v117
    %v120 = vcvt.s32.f32 %v113
    %v121 = vmul.f32 %v120, %v118
    %v122 = vxor.u32 %v121, 2147483648
    %v123 = vsel %vm40, %v122, %v121
    %v124 = vsub.s32 4, %v100
    %v125 = vsel %vm40, %v124, %v100
    %v126 = vsel %vm39, %v37, %v123
    %v127 = vsel %vm39, 0, %v125
    %v128 = vcosq.f32.pop %v126
    %v129 = vsinq.f32.pop %v126
    %vm130 = vweird.f32 %v37
    %v131 = vand.u32 %v127, 3
    %vm132 = vcmp.lt.s32.totalorder %v131, 2
    %vm133 = vcmp.eq.s32.totalorder %v131, 0
    %v134 = vxor.u32 %v129, 2147483648
    %v135 = vsel %vm133, %v128, %v134
    %vm136 = vcmp.eq.s32.totalorder %v131, 2
    %v137 = vxor.u32 %v128, 2147483648
    %v138 = vsel %vm136, %v137, %v129
    %v139 = vsel %vm132, %v135, %v138
    %v140 = vsel %vm130, nan, %v139
    %v141 = vand.u32 2147483647, %v37
    %vm142 = vcmp.le.f32.partialorder %v141, 0.7853982
    %vm143 = vcmp.lt.s32.totalorder %v37, 0
    %v144 = vand.u32 %v37, 2139095040
    %v145 = vshrl.u32 %v144, 23
    %v146 = vsub.s32 %v145, 127
    %v147 = vand.u32 2147483647, %v37
    %v148 = vand.u32 %v147, 8388607
    %v149 = vor.u32 %v148, 8388608
    %v150 = vsub.s32 0, %v149
    %v151 = vadd.s32 %v146, 1
    %vm152 = vcmp.gt.s32.totalorder %v151, 0
    %v153 = vsel %vm152, %v151, 0
    %v154 = vshrl.u32 %v153, 5
    %v155 = vand.u32 %v153, 31
    %v156 = vsub.s32 32, %v155
    %v157 = vshrl.u32 683565275, %v156
    %v158 = vshll.u32 683565275, %v155
    %v159 = vshrl.u32 2475754826, %v156
    %v160 = vor.u32 %v158, %v159
    %v161 = vshll.u32 2475754826, %v155
    %v162 = vshrl.u32 2131351028, %v156
    %v163 = vor.u32 %v161, %v162
    %v164 = vshll.u32 2131351028, %v155
    %v165 = vshrl.u32 2102212464, %v156
    %v166 = vor.u32 %v164, %v165
    %v167 = vshll.u32 2102212464, %v155
    %v168 = vshrl.u32 920167782, %v156
    %v169 = vor.u32 %v167, %v168
    %v170 = vshll.u32 920167782, %v155
    %v171 = vshrl.u32 1326507024, %v156
    %v172 = vor.u32 %v170, %v171
    %vm173 = vcmp.lt.s32.totalorder %v154, 1
    %vm174 = vcmp.lt.s32.totalorder %v154, 2
    %vm175 = vcmp.lt.s32.totalorder %v154, 3
    %vm176 = vcmp.lt.s32.totalorder %v154, 4
    %v177 = vsel %vm173, %v157, %v160
    %v178 = vsel %vm176, %v166, 2102212464
    %v179 = vsel %vm175, %v163, %v178
    %v180 = vsel %vm174, %v177, %v179
    %v181 = vsel %vm173, %v160, %v163
    %v182 = vsel %vm176, %v169, 920167782
    %v183 = vsel %vm175, %v166, %v182
    %v184 = vsel %vm174, %v181, %v183
    %v185 = vsel %vm173, %v163, %v166
    %v186 = vsel %vm176, %v172, 1326507024
    %v187 = vsel %vm175, %v169, %v186
    %v188 = vsel %vm174, %v185, %v187
    %v189 = vshll.u32 %v149, 8
    %v190 = vmul.u32.u64.compose %v189, %v188
    %v191 = vextract.low.u32 %v190
    %v192 = vextract.high.u32 %v190
    %v193 = vmul.u32.u64.compose %v189, %v184
    %v194 = vextract.low.u32 %v193
    %v195 = vextract.high.u32 %v193
    %v196 = vmul.u32 %v189, %v180
    %v197 = vadd.s32 %v192, %v194
    %vm198 = vc.u32 %v192, %v194
    %v199 = vadd.s32 %v195, 1
    %v200 = vsel %vm198, %v199, %v195
    %v201 = vadd.s32 %v196, %v200
    %v202 = vadd.s32 %v201, 536870912
    %v203 = vshrl.u32 %v202, 30
    %v204 = vshll.u32 %v203, 30
    %v205 = vsub.s32 %v201, %v204
    %vm206 = vcmp.lt.s32.totalorder %v205, 0
    %v207 = vsub.s32 0, %v205
    %v208 = vsel %vm206, %v207, %v205
    %v209 = vclz %v208
    %v210 = vsub.s32 %v209, 2
    %vm211 = vcmp.gt.s32.totalorder 0, %v210
    %v212 = vsel %vm211, 0, %v210
    %v213 = vsub.s32 32, %v212
    %v214 = vshll.u32 %v205, %v212
    %v215 = vshrl.u32 %v197, %v213
    %v216 = vor.u32 %v214, %v215
    %v217 = vsub.s32 4294967266, %v212
    %v218 = vadd.s32 %v217, 127
    %v219 = vshll.u32 %v218, 23
    %v220 = vor.u32 4788187, %v219
    %v221 = vand.u32 2147483647, %v220
    %v223 = vcvt.s32.f32 %v216
    %v224 = vmul.f32 %v223, %v221
    %v225 = vxor.u32 %v224, 2147483648
    %v226 = vsel %vm143, %v225, %v224
    %v227 = vsub.s32 4, %v203
    %v228 = vsel %vm143, %v227, %v203
    %v229 = vsel %vm142, %v37, %v226
    %v230 = vsel %vm142, 0, %v228
    %v231 = vcosq.f32.pop %v229
    %v232 = vsinq.f32.pop %v229
    %vm233 = vweird.f32 %v37
    %v234 = vadd.s32 %v230, 3
    %v235 = vand.u32 %v234, 3
    %vm236 = vcmp.lt.s32.totalorder %v235, 2
    %vm237 = vcmp.eq.s32.totalorder %v235, 0
    %v238 = vxor.u32 %v232, 2147483648
    %v239 = vsel %vm237, %v231, %v238
    %vm240 = vcmp.eq.s32.totalorder %v235, 2
    %v241 = vxor.u32 %v231, 2147483648
    %v242 = vsel %vm240, %v241, %v232
    %v243 = vsel %vm236, %v239, %v242
    %v244 = vsel %vm233, nan, %v243
    %vm245 = vcmask 130048
    %246 = vst.msk [vmem:[#allocation5] sm:$0xff] %vm245, %v140
    %248 = vrot.lane.b32.xlu0 %v140, 16
    %v249 = vpop.permute.xlu0 %248
    %vm251 = vcmask 261248
    %252 = vst.msk [vmem:[#allocation5] sm:$0xff] %vm251, %v249
    %253 = vst.msk [vmem:[#allocation6] sm:$0xff] %vm245, %v244
    %255 = vrot.lane.b32.xlu0 %v244, 16
    %v256 = vpop.permute.xlu0 %255
    %258 = vst.msk [vmem:[#allocation6] sm:$0xff] %vm251, %v256
    // Predicated region
    $region10: #{tpu_custom_call.1} parent=1 // pred_check
      _
    $region11: #{tpu_custom_call.1} parent=1 // pred_check_branch
      %260 = sbr.rel (0) target = $region13
    $region12: #{tpu_custom_call.1} parent=1 // pred_region
      %s262 = ssub.s32 128, 128
      %263 = vsyncadd [#allocation4], %s262
      %s265 = sshll.u32 [#allocation5], 4
      %s266 = int_to_ptr.vmem [resolvable:$true] %s265
      %268 = dma.vmem_to_hbm [thread:$0]  %s266, 128, %s1, [#allocation4]
    $region13: #{tpu_custom_call.1} parent=1 // pred_fallthru
      _
    // Predicated region
    $region14: #{tpu_custom_call.1} parent=1 // pred_check
      _
    $region15: #{tpu_custom_call.1} parent=1 // pred_check_branch
      %270 = sbr.rel (0) target = $region17
    $region16: #{tpu_custom_call.1} parent=1 // pred_region
      %s272 = ssub.s32 128, 128
      %273 = vsyncadd [#allocation7], %s272
      %s275 = sshll.u32 [#allocation6], 4
      %s276 = int_to_ptr.vmem [resolvable:$true] %s275
      %278 = dma.vmem_to_hbm [thread:$0]  %s276, 128, %s2, [#allocation7]
    $region17: #{tpu_custom_call.1} parent=1 // pred_fallthru
      _
    // Predicated region
    $region18: #{tpu_custom_call.1} parent=1 // pred_check
      _
    $region19: #{tpu_custom_call.1} parent=1 // pred_check_branch
      %280 = sbr.rel (0) target = $region21
    $region20: #{tpu_custom_call.1} parent=1 // pred_region
      %281 = dma.done [#allocation4], 128
    $region21: #{tpu_custom_call.1} parent=1 // pred_fallthru
      _
    // Predicated region
    $region22: #{tpu_custom_call.1} parent=1 // pred_check
      _
    $region23: #{tpu_custom_call.1} parent=1 // pred_check_branch
      %283 = sbr.rel (0) target = $region25
    $region24: #{tpu_custom_call.1} parent=1 // pred_region
      %284 = dma.done [#allocation7], 128
    $region25: #{tpu_custom_call.1} parent=1 // pred_fallthru
      _
    %285 = vsyncpa [#allocation3], 1
    %286 = vsyncpa [#allocation4], 1
    %287 = vsyncpa [#allocation7], 1

</llo_original>
